<compile_context>
chip_gen: v7x
topology: tpu7x:2x2x1
jax: 0.10.0
libtpu: 0.0.40
codegen_flags: <defaults>
</compile_context>

<pallas_src>
import math

import jax
import jax.numpy as jnp
from jax.experimental import pallas as pl
from jax.experimental.pallas import tpu as pltpu

DOMAIN_DIM = 12
HEAD_SIZE = 32


# ---------------------------------------------------------------------------
# Kernels
# ---------------------------------------------------------------------------
def _attn_kernel_small(x_ref, u_ref, c_ref, out_ref):
    """Unpacked path. x_ref/out_ref: (2, TB, D).  Pure VPU/XLU streaming."""
    xv = x_ref[0]                                   # (TB, D)
    xa = x_ref[1]                                   # (TB, D)
    u = u_ref[...]                                  # (2, D)  folded key dirs

    # per-row dots with the folded query
    dv = jnp.sum(xv * u[0:1, :], axis=1, keepdims=True) + c_ref[0]   # (TB, 1)
    da = jnp.sum(xa * u[1:2, :], axis=1, keepdims=True) + c_ref[1]   # (TB, 1)

    # exact 2-way softmax via the sigmoid identity (no approx reciprocal)
    sv = 1.0 / (1.0 + jnp.exp(da - dv))
    sa = 1.0 - sv

    out_ref[0] = (xv * sv).astype(out_ref.dtype)
    out_ref[1] = (xa * sa).astype(out_ref.dtype)


def _attn_kernel_packed(x_ref, u_ref, e_ref, c_ref, out_ref):
    """Lane-dense path. x_ref/out_ref: (2, TR, PACK*D) -- PACK logical batch
    rows packed into each 384-lane row.  Per-row dots use one MXU matmul
    against the block-diagonal fold matrix u_ref[d] (PACK*D, PACK); scores are
    expanded back to PACK*D lanes with a 0/1 matmul (e_ref)."""
    xv = x_ref[0]                                   # (TR, PACK*D)
    xa = x_ref[1]

    dv = jnp.dot(xv, u_ref[0], preferred_element_type=jnp.float32) + c_ref[0]  # (TR, PACK)
    da = jnp.dot(xa, u_ref[1], preferred_element_type=jnp.float32) + c_ref[1]

    sv = 1.0 / (1.0 + jnp.exp(da - dv))             # exact 2-way softmax
    sa = 1.0 - sv

    e = e_ref[...]                                  # (PACK, PACK*D)
    scale_v = jnp.dot(sv, e, preferred_element_type=jnp.float32)    # (TR, PACK*D)
    scale_a = jnp.dot(sa, e, preferred_element_type=jnp.float32)

    out_ref[0] = (xv * scale_v).astype(out_ref.dtype)
    out_ref[1] = (xa * scale_a).astype(out_ref.dtype)


# ---------------------------------------------------------------------------
# Tiling heuristics (budgeting the *padded* VMEM footprint)
# ---------------------------------------------------------------------------
def _tile_small(B):
    """Unpacked layout: per-step scoped VMEM ~= 4 buffers * 2 domains * tb *
    128(lane-padded) * 4 B = 4096*tb bytes.  tb=2048 -> 8 MiB, safely under
    the v5e 16 MiB default scoped limit."""
    if B <= 2048:
        return B                                   # single full block
    cap = min(2048, (B // 2) // 8 * 8)
    best = None
    t = 8
    while t <= cap:
        if B % t == 0:
            best = t
        t += 8
    # No multiple-of-8 divisor: fall back to one full block (always legal).
    return best if best is not None else B


def _tile_packed(rows, lanes):
    """Packed layout: per-step scoped VMEM ~= 4 buffers * 2 domains * tr *
    lanes * 4 B = 32*tr*lanes bytes.  Cap at ~6 MiB/step and keep >= 2 grid
    steps when possible so v7x's second TensorCore gets a share."""
    if rows < 16:
        return rows
    cap = max(8, min((6 << 20) // (lanes * 32), rows // 2))
    cap = (cap // 8) * 8
    best = None
    t = 8
    while t <= cap:
        if rows % t == 0:
            best = t
        t += 8
    return best if best is not None else rows      # full block fallback


# ---------------------------------------------------------------------------
# Wrapper
# ---------------------------------------------------------------------------
def _fold_params(params):
    """Grid-invariant algebraic fold (runs once, outside the kernel)."""
    q = params["gw"] @ params["wq"].T + params["bq"]                    # (H,)
    u = jnp.stack([params["wv"].T @ q,
                   params["wa"].T @ q], axis=0).astype(jnp.float32)     # (2, D)
    c = jnp.stack([jnp.dot(params["bv"], q),
                   jnp.dot(params["ba"], q)]).astype(jnp.float32)       # (2,)
    return u, c


def attention_mechanism(enc, params):
    """enc: stacked (2, B, D) float32 with enc[0]='v_latents', enc[1]='attr'.

    Callers should pass the stacked tensor directly (cheap to produce at the
    source) so the kernel sees one input/output window and the wrapper never
    has to copy.  Returns {'v_latents': (B, D), 'attr': (B, D)}."""
    assert enc.ndim == 3 and enc.shape[0] == 2, enc.shape
    _, B, D = enc.shape
    u, c = _fold_params(params)

    pack = 128 // math.gcd(D, 128)      # logical rows per 128-aligned packed row (D=12 -> 32)
    lanes = pack * D                    # 384 for D=12 (= 3 * 128 lanes)
    c_spec = pl.BlockSpec(memory_space=pltpu.MemorySpace.SMEM)
    cparams = pltpu.CompilerParams(dimension_semantics=("parallel",))

    if B % pack == 0 and B >= pack:
        # ---------------- lane-dense packed path ----------------
        rows = B // pack
        tr = _tile_packed(rows, lanes)
        xp = enc.reshape(2, rows, lanes)                   # free row-major view

        eye = jnp.eye(pack, dtype=jnp.float32)
        # Block-diagonal fold matrices: U[d, j*D+k, j] = u[d, k]
        U = jnp.einsum("dk,jm->djkm", u, eye).reshape(2, lanes, pack)
        # 0/1 expansion matrix: E[j, j*D+k] = 1
        E = jnp.repeat(eye, D, axis=1)                     # (pack, lanes)

        x_spec = pl.BlockSpec((2, tr, lanes), lambda i: (0, i, 0))
        out = pl.pallas_call(
            _attn_kernel_packed,
            out_shape=jax.ShapeDtypeStruct((2, rows, lanes), enc.dtype),
            grid=(rows // tr,),
            in_specs=[x_spec,
                      pl.BlockSpec((2, lanes, pack), lambda i: (0, 0, 0)),
                      pl.BlockSpec((pack, lanes), lambda i: (0, 0)),
                      c_spec],
            out_specs=x_spec,
            compiler_params=cparams,
        )(xp, U, E, c)
        out = out.reshape(2, B, D)
    else:
        # ---------------- small / non-packable batches ----------------
        tb = _tile_small(B)
        x_spec = pl.BlockSpec((2, tb, D), lambda i: (0, i, 0))
        out = pl.pallas_call(
            _attn_kernel_small,
            out_shape=jax.ShapeDtypeStruct((2, B, D), enc.dtype),
            grid=(B // tb,),
            in_specs=[x_spec,
                      pl.BlockSpec((2, D), lambda i: (0, 0)),
                      c_spec],
            out_specs=x_spec,
            compiler_params=cparams,
        )(enc, u, c)

    return {"v_latents": out[0], "attr": out[1]}


# ---------------------------------------------------------------------------
# Pure-JAX reference mirroring the PyTorch forward
# ---------------------------------------------------------------------------
def reference(enc, params):
    q = params["gw"] @ params["wq"].T + params["bq"]                 # (H,)
    kv = enc[0] @ params["wv"].T + params["bv"]                      # (B, H)
    ka = enc[1] @ params["wa"].T + params["ba"]                      # (B, H)
    dots = jnp.stack([jnp.sum(kv * q, axis=1),
                      jnp.sum(ka * q, axis=1)], axis=0)              # (2, B)
    scores = jax.nn.softmax(dots, axis=0)
    return {"v_latents": enc[0] * scores[0][:, None],
            "attr": enc[1] * scores[1][:, None]}


if __name__ == "__main__":
    key = jax.random.PRNGKey(0)
    ks = jax.random.split(key, 9)

    D, H = DOMAIN_DIM, HEAD_SIZE

    # Deterministic parameter init (PyTorch nn.Linear convention: W is (H, D)).
    bound = 1.0 / jnp.sqrt(D)
    params = {
        "wv": jax.random.uniform(ks[0], (H, D), jnp.float32, -bound, bound),
        "bv": jax.random.uniform(ks[1], (H,), jnp.float32, -bound, bound),
        "wa": jax.random.uniform(ks[2], (H, D), jnp.float32, -bound, bound),
        "ba": jax.random.uniform(ks[3], (H,), jnp.float32, -bound, bound),
        "wq": jax.random.uniform(ks[4], (H, D), jnp.float32, -bound, bound),
        "bq": jax.random.uniform(ks[5], (H,), jnp.float32, -bound, bound),
        "gw": jax.random.normal(ks[6], (D,), jnp.float32),           # gw_vector
    }

    # (1) Shipped size: B=8 -> unpacked path (single block).
    enc_small = jax.random.normal(ks[7], (2, 8, D), jnp.float32)
    out_small = attention_mechanism(enc_small, params)
    jax.block_until_ready(out_small)
    ref_small = reference(enc_small, params)
    for name in ("v_latents", "attr"):
        assert jnp.allclose(out_small[name], ref_small[name],
                            atol=1e-4, rtol=1e-4), ("small", name)

    # (2) Large batch: B=1024 -> lane-dense packed path, 2-step "parallel" grid.
    enc_big = jax.random.normal(ks[8], (2, 1024, D), jnp.float32)
    out_big = attention_mechanism(enc_big, params)
    jax.block_until_ready(out_big)
    ref_big = reference(enc_big, params)
    for name in ("v_latents", "attr"):
        assert jnp.allclose(out_big[name], ref_big[name],
                            atol=1e-4, rtol=1e-4), ("packed", name)

    print("KERNEL_OK")
</pallas_src>

<mosaic_0001>
module attributes {stable_mosaic.version = 11 : i64} {
  func.func @_attn_kernel_small(%arg0: i32, %arg1: memref<2x8x12xf32, #tpu.memory_space<vmem>>, %arg2: memref<2x12xf32, #tpu.memory_space<vmem>>, %arg3: memref<2xf32, #tpu.memory_space<smem>>, %arg4: memref<2x8x12xf32, #tpu.memory_space<vmem>>) attributes {dimension_semantics = [#tpu.dimension_semantics<parallel>], iteration_bounds = array<i64: 1>, scalar_prefetch = 0 : i64, scratch_operands = 0 : i64, tpu.core_type = #tpu.core_type<tc>, window_params = [{transform_indices = @transform_0, window_bounds = array<i64: 2, 8, 12>}, {pipeline_mode = #tpu.pipeline_mode<synchronous>, transform_indices = @transform_1, window_bounds = array<i64: 2, 12>}, {transform_indices = @transform_2, window_bounds = array<i64: 2>}, {transform_indices = @transform_3, window_bounds = array<i64: 2, 8, 12>}]} {
    %c0 = arith.constant 0 : index
    %c0_0 = arith.constant 0 : index
    %c0_1 = arith.constant 0 : index
    %0 = vector.load %arg1[%c0, %c0_0, %c0_1] : memref<2x8x12xf32, #tpu.memory_space<vmem>>, vector<1x8x12xf32>
    %1 = vector.shape_cast %0 : vector<1x8x12xf32> to vector<8x12xf32>
    %c1 = arith.constant 1 : index
    %c0_2 = arith.constant 0 : index
    %c0_3 = arith.constant 0 : index
    %2 = vector.load %arg1[%c1, %c0_2, %c0_3] : memref<2x8x12xf32, #tpu.memory_space<vmem>>, vector<1x8x12xf32>
    %3 = vector.shape_cast %2 : vector<1x8x12xf32> to vector<8x12xf32>
    %c0_4 = arith.constant 0 : index
    %c0_5 = arith.constant 0 : index
    %4 = vector.load %arg2[%c0_4, %c0_5] : memref<2x12xf32, #tpu.memory_space<vmem>>, vector<2x12xf32>
    %5 = vector.extract_strided_slice %4 {offsets = [0, 0], sizes = [1, 12], strides = [1, 1]} : vector<2x12xf32> to vector<1x12xf32>
    %6 = vector.broadcast %5 : vector<1x12xf32> to vector<8x12xf32>
    %7 = arith.mulf %1, %6 : vector<8x12xf32>
    %cst = arith.constant dense<0.000000e+00> : vector<8xf32>
    %8 = vector.multi_reduction <add>, %7, %cst [1] : vector<8x12xf32> to vector<8xf32>
    %9 = vector.shape_cast %8 : vector<8xf32> to vector<8x1xf32>
    %c0_6 = arith.constant 0 : index
    %10 = memref.load %arg3[%c0_6] : memref<2xf32, #tpu.memory_space<smem>>
    %11 = vector.broadcast %10 : f32 to vector<8x1xf32>
    %12 = arith.addf %9, %11 : vector<8x1xf32>
    %13 = vector.extract_strided_slice %4 {offsets = [1, 0], sizes = [1, 12], strides = [1, 1]} : vector<2x12xf32> to vector<1x12xf32>
    %14 = vector.broadcast %13 : vector<1x12xf32> to vector<8x12xf32>
    %15 = arith.mulf %3, %14 : vector<8x12xf32>
    %cst_7 = arith.constant dense<0.000000e+00> : vector<8xf32>
    %16 = vector.multi_reduction <add>, %15, %cst_7 [1] : vector<8x12xf32> to vector<8xf32>
    %17 = vector.shape_cast %16 : vector<8xf32> to vector<8x1xf32>
    %c1_8 = arith.constant 1 : index
    %18 = memref.load %arg3[%c1_8] : memref<2xf32, #tpu.memory_space<smem>>
    %19 = vector.broadcast %18 : f32 to vector<8x1xf32>
    %20 = arith.addf %17, %19 : vector<8x1xf32>
    %21 = arith.subf %20, %12 : vector<8x1xf32>
    %22 = math.exp %21 : vector<8x1xf32>
    %cst_9 = arith.constant 1.000000e+00 : f32
    %23 = vector.broadcast %cst_9 : f32 to vector<8x1xf32>
    %24 = arith.addf %23, %22 : vector<8x1xf32>
    %cst_10 = arith.constant 1.000000e+00 : f32
    %25 = vector.broadcast %cst_10 : f32 to vector<8x1xf32>
    %26 = arith.divf %25, %24 : vector<8x1xf32>
    %cst_11 = arith.constant 1.000000e+00 : f32
    %27 = vector.broadcast %cst_11 : f32 to vector<8x1xf32>
    %28 = arith.subf %27, %26 : vector<8x1xf32>
    %29 = vector.broadcast %26 : vector<8x1xf32> to vector<8x12xf32>
    %30 = arith.mulf %1, %29 : vector<8x12xf32>
    %c0_12 = arith.constant 0 : index
    %c0_13 = arith.constant 0 : index
    %c0_14 = arith.constant 0 : index
    %31 = vector.load %arg4[%c0_12, %c0_13, %c0_14] : memref<2x8x12xf32, #tpu.memory_space<vmem>>, vector<1x8x12xf32>
    %32 = vector.shape_cast %31 : vector<1x8x12xf32> to vector<8x12xf32>
    %33 = vector.shape_cast %30 : vector<8x12xf32> to vector<1x8x12xf32>
    tpu.vector_store %arg4[%c0_12, %c0_13, %c0_14], %33 {strides = array<i32>} : memref<2x8x12xf32, #tpu.memory_space<vmem>>, vector<1x8x12xf32>,
    %34 = vector.broadcast %28 : vector<8x1xf32> to vector<8x12xf32>
    %35 = arith.mulf %3, %34 : vector<8x12xf32>
    %c1_15 = arith.constant 1 : index
    %c0_16 = arith.constant 0 : index
    %c0_17 = arith.constant 0 : index
    %36 = vector.load %arg4[%c1_15, %c0_16, %c0_17] : memref<2x8x12xf32, #tpu.memory_space<vmem>>, vector<1x8x12xf32>
    %37 = vector.shape_cast %36 : vector<1x8x12xf32> to vector<8x12xf32>
    %38 = vector.shape_cast %35 : vector<8x12xf32> to vector<1x8x12xf32>
    tpu.vector_store %arg4[%c1_15, %c0_16, %c0_17], %38 {strides = array<i32>} : memref<2x8x12xf32, #tpu.memory_space<vmem>>, vector<1x8x12xf32>,
    return
  }
  func.func @transform_0(%arg0: i32) -> (i32, i32, i32) {
    %c0_i32 = arith.constant 0 : i32
    %c0_i32_0 = arith.constant 0 : i32
    %c0_i32_1 = arith.constant 0 : i32
    return %c0_i32, %arg0, %c0_i32_0 : i32, i32, i32
  }
  func.func @transform_1(%arg0: i32) -> (i32, i32) {
    %c0_i32 = arith.constant 0 : i32
    %c0_i32_0 = arith.constant 0 : i32
    %c0_i32_1 = arith.constant 0 : i32
    return %c0_i32, %c0_i32_0 : i32, i32
  }
  func.func @transform_2(%arg0: i32) -> i32 {
    %c0_i32 = arith.constant 0 : i32
    %c0_i32_0 = arith.constant 0 : i32
    return %c0_i32 : i32
  }
  func.func @transform_3(%arg0: i32) -> (i32, i32, i32) {
    %c0_i32 = arith.constant 0 : i32
    %c0_i32_0 = arith.constant 0 : i32
    %c0_i32_1 = arith.constant 0 : i32
    return %c0_i32, %arg0, %c0_i32_0 : i32, i32, i32
  }
}

</mosaic_0001>

<llo_original>
// kernel: tpu_custom_call.1
$region0: #{tpu_custom_call.1}
  #allocation0 [shape = 'u32[]', space=smem, size = 0x4, offset = 0x4, fixed_abs, tag = 'smem constant byte address 0x4 - core index']
  #allocation1 [shape = 'u32[144,128]{1,0:T(1,128)}', space=vmem, size = 0x12000, scoped, tag = 'internal scratch']
  %s0 = inlined_call_operand.hbm [shape: f32[2,8,12], index: 0, kind: input, shape index: {}]
  %s1 = inlined_call_operand.vmem [shape: f32[2,12], index: 1, kind: input, shape index: {}]
  %s2 = inlined_call_operand.vmem [shape: f32[2], index: 2, kind: input, shape index: {}]
  %s3 = inlined_call_operand.hbm [shape: f32[2,8,12], index: 3, kind: output, shape index: {}]
  %s4 = sld [smem:[#allocation0]]
  $region30: #{tpu_custom_call.1} parent=0
    _
  %s6 = ssub.s32 1, %s4
  %s7 = scalar_select 0, %s6, %s4
  $region1: #{tpu_custom_call.1} parent=0
    #allocation2 [shape = 'u8[8192]{0}', space=vmem, size = 0x2000, scoped, tag = 'input window, operand 0, single buffered']
    #allocation3 [shape = 's32[1]{0}', space=sflag, size = 0x4, scoped, tag = 'scoped memory for tpu_custom_call.1']
    #allocation4 [shape = 's32[1]{0}', space=sflag, size = 0x4, scoped, tag = 'scoped memory for tpu_custom_call.1']
    #allocation5 [shape = 's32[1]{0}', space=sflag, size = 0x4, scoped, tag = 'scoped memory for tpu_custom_call.1']
    #allocation6 [shape = 'u8[512]{0}', space=smem, size = 0x200, scoped, tag = 'input window, operand 2, single buffered']
    #allocation7 [shape = 'u8[8192]{0}', space=vmem, size = 0x2000, scoped, tag = 'output window, operand 0, single buffered']
    %8 = vsyncpa [#allocation3], 0
    %9 = vsyncpa [#allocation5], 0
    %10 = vsyncpa [#allocation4], 0
    // Predicated region
    $region2: #{tpu_custom_call.1} parent=1 // pred_check
      _
    $region3: #{tpu_custom_call.1} parent=1 // pred_check_branch
      %12 = sbr.rel (0) target = $region5
    $region4: #{tpu_custom_call.1} parent=1 // pred_region
      %s14 = ssub.s32 256, 256
      %15 = vsyncadd [#allocation3], %s14
      %s16 = sshll.u32 [#allocation2], 4
      %s17 = int_to_ptr.vmem [resolvable:$true] %s16
      %22 = dma.hbm_to_vmem [thread:$0]  %s0, 256, %s17, [#allocation3], 128, 128, 8
    $region5: #{tpu_custom_call.1} parent=1 // pred_fallthru
      _
    // Predicated region
    $region6: #{tpu_custom_call.1} parent=1 // pred_check
      _
    $region7: #{tpu_custom_call.1} parent=1 // pred_check_branch
      %24 = sbr.rel (0) target = $region9
    $region8: #{tpu_custom_call.1} parent=1 // pred_region
      _
    $region9: #{tpu_custom_call.1} parent=1 // pred_fallthru
      _
    // Predicated region
    $region10: #{tpu_custom_call.1} parent=1 // pred_check
      _
    $region11: #{tpu_custom_call.1} parent=1 // pred_check_branch
      %26 = sbr.rel (0) target = $region13
    $region12: #{tpu_custom_call.1} parent=1 // pred_region
      %s28 = ssub.s32 16, 16
      %29 = vsyncadd [#allocation5], %s28
      %s31 = sshll.u32 %s2, 4
      %s32 = int_to_ptr.vmem [resolvable:$true] %s31
      %34 = dma.vmem_to_smem %s32, 16, [#allocation6], [#allocation5]
    $region13: #{tpu_custom_call.1} parent=1 // pred_fallthru
      _
    // Predicated region
    $region14: #{tpu_custom_call.1} parent=1 // pred_check
      _
    $region15: #{tpu_custom_call.1} parent=1 // pred_check_branch
      %36 = sbr.rel (0) target = $region17
    $region16: #{tpu_custom_call.1} parent=1 // pred_region
      %37 = dma.done [#allocation3], 256
    $region17: #{tpu_custom_call.1} parent=1 // pred_fallthru
      _
    // Predicated region
    $region18: #{tpu_custom_call.1} parent=1 // pred_check
      _
    $region19: #{tpu_custom_call.1} parent=1 // pred_check_branch
      %39 = sbr.rel (0) target = $region21
    $region20: #{tpu_custom_call.1} parent=1 // pred_region
      %40 = dma.done [#allocation5], 16
    $region21: #{tpu_custom_call.1} parent=1 // pred_fallthru
      _
    %41 = sfence
    %v42 = vld [vmem:[#allocation2] sm:$0xff]
    %s43 = scalar_lea.vmem [#allocation2], 8
    %v44 = vld [vmem:[%s43] sm:$0xff]
    %v45 = vld [vmem:[%s1] sm:$0x3]
    %v46 = vlaneseq
    %v47 = vshrl.u32 %v46, 7
    %v48 = vsub.s32 0, %v47
    %v49 = vrot.slane %v45, %v48
    %v50 = vmul.f32 %v42, %v49
    %vm51 = vcmask 97280
    %v52 = vsel %vm51, %v50, 0.0
    %53 = vadd.xlane.f32.xlu0 %v52
    %v54 = vpop.xlane.xlu0 %53
    %s55 = sld [smem:[#allocation6]]
    %v56 = vstv %s55
    %v57 = vadd.f32 %v54, %v56
    %v58 = vlaneseq
    %v59 = vshrl.u32 %v58, 7
    %v60 = vsub.s32 1, %v59
    %v61 = vrot.slane %v45, %v60
    %v62 = vmul.f32 %v44, %v61
    %v63 = vsel %vm51, %v62, 0.0
    %64 = vadd.xlane.f32.xlu0 %v63
    %v65 = vpop.xlane.xlu0 %64
    %s66 = sld [smem:[#allocation6 + $0x1]]
    %v67 = vstv %s66
    %v68 = vadd.f32 %v65, %v67
    %v69 = vsub.f32 %v68, %v57
    %v70 = vmul.f32 %v69, 1.442695
    %v71 = vpow.pop %v70
    %v72 = vadd.f32 %v71, 1.0
    %v73 = vrcp.pop %v72
    %v74 = vmul.f32 1.0, %v73
    %v75 = vsub.f32 1.0, %v74
    %v76 = vmul.f32 %v42, %v74
    %77 = vst.msk [vmem:[#allocation7] sm:$0xff] %vm51, %v76
    %v78 = vmul.f32 %v44, %v75
    %s79 = scalar_lea.vmem [#allocation7], 8
    %80 = vst.msk [vmem:[%s79] sm:$0xff] %vm51, %v78
    // Predicated region
    $region22: #{tpu_custom_call.1} parent=1 // pred_check
      _
    $region23: #{tpu_custom_call.1} parent=1 // pred_check_branch
      %82 = sbr.rel (0) target = $region25
    $region24: #{tpu_custom_call.1} parent=1 // pred_region
      %s84 = ssub.s32 256, 256
      %85 = vsyncadd [#allocation4], %s84
      %s86 = sshll.u32 [#allocation7], 4
      %s87 = int_to_ptr.vmem [resolvable:$true] %s86
      %92 = dma.vmem_to_hbm [thread:$0]  %s87, 256, %s3, [#allocation4], 128, 128, 8
    $region25: #{tpu_custom_call.1} parent=1 // pred_fallthru
      _
    // Predicated region
    $region26: #{tpu_custom_call.1} parent=1 // pred_check
      _
    $region27: #{tpu_custom_call.1} parent=1 // pred_check_branch
      %94 = sbr.rel (0) target = $region29
    $region28: #{tpu_custom_call.1} parent=1 // pred_region
      %95 = dma.done [#allocation4], 256
    $region29: #{tpu_custom_call.1} parent=1 // pred_fallthru
      _
    %96 = vsyncpa [#allocation3], 1
    %97 = vsyncpa [#allocation4], 1
    %98 = vsyncpa [#allocation5], 1

</llo_original>
